<compile_context>
chip_gen: v7x
topology: tpu7x:2x2x1
jax: 0.10.0
libtpu: 0.0.40
codegen_flags: <defaults>
</compile_context>

<pallas_src>
import jax
import jax.numpy as jnp
from jax.experimental import pallas as pl
from jax.experimental.pallas import tpu as pltpu

_LANES = 128
_SUBLANE_ALIGN = 32                    # covers sublane packing for f32/bf16/int8
_MIN_PALLAS_BYTES = 256 * 1024         # below this, XLA's fused maximum is at roofline
_GRID_SPLIT_BYTES = 2 * 1024 * 1024    # above this, keep >= num_tensorcores grid steps
_TARGET_BLOCK_BYTES = 4 * 1024 * 1024  # ~4 MiB blocks amortize the ~0.35 us/step cost


def _num_tensorcores() -> int:
    """Best-effort TensorCores-per-chip (v7x=2, v5e/v6e=1).

    Falls back to 2: splitting the grid into >=2 steps costs only one extra
    ~0.35 us step on single-core chips but halves streaming time on v7x.
    """
    try:
        info = pltpu.get_tpu_info()
        for attr in ("num_cores", "core_count", "num_tensorcores",
                     "tensorcores_per_chip", "num_cores_per_chip"):
            v = getattr(info, attr, None)
            if isinstance(v, int) and v > 0:
                return v
    except Exception:
        pass
    return 2


def _round_down(value: int, multiple: int) -> int:
    return max(multiple, (value // multiple) * multiple)


def lower_bound(x: jax.Array, bound: float, *,
                donate: bool = False,
                target_block_bytes: int = _TARGET_BLOCK_BYTES,
                min_pallas_bytes: int = _MIN_PALLAS_BYTES) -> jax.Array:
    """Computes elementwise max(x, bound), i.e. LowerBound.forward.

    Notes:
      * The PyTorch module's custom backward (identity gradient when x is
        pushed toward the bound) only affects autodiff; the forward pass is
        exactly jnp.maximum(x, bound).
      * donate=True aliases the kernel's (reshaped) input buffer to its output.
        It never reduces HBM traffic (the output must still be written); it
        only saves memory footprint, and only when the caller actually donates
        x at the jit boundary (otherwise XLA inserts a defensive copy).
    """
    # TODO(synk): custom VJP (identity grad when x moves toward the bound) is an
    # autodiff concern only; forward semantics are exact here.
    orig_shape = x.shape
    dtype = x.dtype
    total = x.size
    if total == 0:
        return x

    itemsize = jnp.dtype(dtype).itemsize
    tensor_bytes = total * itemsize
    # Bound pinned to x.dtype: no weak-type promotion; folds to an immediate.
    bound_scalar = jnp.dtype(dtype).type(float(bound))

    # Tiny or lane-misaligned inputs: XLA's fused maximum is already at
    # roofline and avoids launch overhead / pad+slice whole-tensor HBM passes.
    if tensor_bytes < min_pallas_bytes or total % _LANES != 0:
        return jnp.maximum(x, bound_scalar)

    rows = total // _LANES
    x2d = x.reshape(rows, _LANES)  # element count is lane-aligned; no padding

    # Byte-targeted block sizing keeps every dtype at the same roofline point.
    tile_rows = _round_down(target_block_bytes // (_LANES * itemsize),
                            _SUBLANE_ALIGN)

    # Keep >= num_tensorcores grid steps for medium/large tensors so the
    # "parallel" grid axis can shard across both TensorCores of a v7x megacore.
    if tensor_bytes >= _GRID_SPLIT_BYTES:
        cores = _num_tensorcores()
        if cores >= 2:
            tile_rows = min(tile_rows,
                            _round_down(rows // cores, _SUBLANE_ALIGN))

    block_rows = rows if rows <= tile_rows else tile_rows
    grid = (pl.cdiv(rows, block_rows),)

    # in + out, double buffered, plus headroom; explicit limit so a 4 MiB block
    # is legal under v5e's 16 MiB scoped-VMEM default (physical VMEM is larger
    # on every generation, so this never exceeds hardware).
    vmem_limit = 2 * 2 * block_rows * _LANES * itemsize + 2 * 1024 * 1024
    vmem_limit = int(max(vmem_limit, 16 * 1024 * 1024))

    def _kernel(x_ref, o_ref):
        # One vmax per vreg; purely HBM-streaming.
        o_ref[...] = jnp.maximum(x_ref[...], bound_scalar)

    out2d = pl.pallas_call(
        _kernel,
        out_shape=jax.ShapeDtypeStruct((rows, _LANES), dtype),
        grid_spec=pltpu.PrefetchScalarGridSpec(
            num_scalar_prefetch=0,
            grid=grid,
            in_specs=[pl.BlockSpec((block_rows, _LANES), lambda i: (i, 0))],
            out_specs=pl.BlockSpec((block_rows, _LANES), lambda i: (i, 0)),
        ),
        compiler_params=pltpu.CompilerParams(
            dimension_semantics=("parallel",),
            vmem_limit_bytes=vmem_limit,
        ),
        cost_estimate=pl.CostEstimate(
            flops=total, transcendentals=0, bytes_accessed=2 * tensor_bytes),
        input_output_aliases=({0: 0} if donate else {}),
    )(x2d)

    return out2d.reshape(orig_shape)


if __name__ == "__main__":
    bound_value = 0.11  # the registered-buffer "parameter"
    key = jax.random.PRNGKey(0)
    k1, k2, k3 = jax.random.split(key, 3)

    # NCHW activations typical of compression nets using LowerBound.
    x = jax.random.normal(k1, (2, 4, 16, 16), dtype=jnp.float32)
    ref = jnp.maximum(x, jnp.float32(bound_value))

    # Default path: tiny tensor -> XLA fallback by design.
    y_small = jax.block_until_ready(lower_bound(x, bound_value))
    assert y_small.shape == x.shape and y_small.dtype == x.dtype
    assert bool(jnp.all(y_small == ref))

    # Force the Pallas kernel at this small shape (single grid step, full block).
    y_pallas = jax.block_until_ready(lower_bound(x, bound_value, min_pallas_bytes=0))
    assert bool(jnp.all(y_pallas == ref))

    # Multi-step grid with a ragged last block: 80 rows, 32-row blocks -> grid=(3,).
    x2 = jax.random.normal(k2, (2, 8, 32, 20), dtype=jnp.float32)  # 10240 elems
    y2 = jax.block_until_ready(
        lower_bound(x2, bound_value, min_pallas_bytes=0,
                    target_block_bytes=32 * _LANES * 4))
    assert bool(jnp.all(y2 == jnp.maximum(x2, jnp.float32(bound_value))))

    # bf16: byte-targeted block sizing + dtype-pinned bound (no promotion).
    x3 = jax.random.normal(k3, (2, 4, 16, 16), dtype=jnp.bfloat16)
    y3 = jax.block_until_ready(lower_bound(x3, bound_value, min_pallas_bytes=0))
    assert y3.dtype == jnp.bfloat16
    assert bool(jnp.all(y3 == jnp.maximum(x3, jnp.bfloat16(bound_value))))

    # Truly lane-misaligned shape -> documented XLA fallback (no pad+slice passes).
    x4 = jax.random.normal(jax.random.PRNGKey(0), (2, 3, 7, 5), dtype=jnp.float32)
    y4 = jax.block_until_ready(lower_bound(x4, bound_value))
    assert bool(jnp.all(y4 == jnp.maximum(x4, jnp.float32(bound_value))))

    print("KERNEL_OK")
</pallas_src>

<mosaic_0001>
module attributes {stable_mosaic.version = 11 : i64} {
  func.func @_kernel(%arg0: i32, %arg1: memref<16x128xf32, #tpu.memory_space<vmem>>, %arg2: memref<16x128xf32, #tpu.memory_space<vmem>>) attributes {dimension_semantics = [#tpu.dimension_semantics<parallel>], iteration_bounds = array<i64: 1>, scalar_prefetch = 0 : i64, scratch_operands = 0 : i64, tpu.core_type = #tpu.core_type<tc>, window_params = [{transform_indices = @transform_0, window_bounds = array<i64: 16, 128>}, {transform_indices = @transform_1, window_bounds = array<i64: 16, 128>}]} {
    %c0 = arith.constant 0 : index
    %c0_0 = arith.constant 0 : index
    %0 = vector.load %arg1[%c0, %c0_0] : memref<16x128xf32, #tpu.memory_space<vmem>>, vector<16x128xf32>
    %cst = arith.constant 1.100000e-01 : f32
    %1 = vector.broadcast %cst : f32 to vector<16x128xf32>
    %2 = arith.maximumf %0, %1 : vector<16x128xf32>
    %c0_1 = arith.constant 0 : index
    %c0_2 = arith.constant 0 : index
    %3 = vector.load %arg2[%c0_1, %c0_2] : memref<16x128xf32, #tpu.memory_space<vmem>>, vector<16x128xf32>
    tpu.vector_store %arg2[%c0_1, %c0_2], %2 {strides = array<i32>} : memref<16x128xf32, #tpu.memory_space<vmem>>, vector<16x128xf32>,
    return
  }
  func.func @transform_0(%arg0: i32) -> (i32, i32) {
    %c0_i32 = arith.constant 0 : i32
    %c0_i32_0 = arith.constant 0 : i32
    return %arg0, %c0_i32 : i32, i32
  }
  func.func @transform_1(%arg0: i32) -> (i32, i32) {
    %c0_i32 = arith.constant 0 : i32
    %c0_i32_0 = arith.constant 0 : i32
    return %arg0, %c0_i32 : i32, i32
  }
}

</mosaic_0001>

<llo_original>
// kernel: tpu_custom_call.1
$region0: #{tpu_custom_call.1}
  #allocation0 [shape = 'u32[]', space=smem, size = 0x4, offset = 0x4, fixed_abs, tag = 'smem constant byte address 0x4 - core index']
  #allocation1 [shape = 'u32[144,128]{1,0:T(1,128)}', space=vmem, size = 0x12000, scoped, tag = 'internal scratch']
  %s0 = inlined_call_operand.hbm [shape: f32[16,128], index: 0, kind: input, shape index: {}]
  %s1 = inlined_call_operand.hbm [shape: f32[16,128], index: 1, kind: output, shape index: {}]
  %s2 = sld [smem:[#allocation0]]
  $region18: #{tpu_custom_call.1} parent=0
    _
  %s4 = ssub.s32 1, %s2
  %s5 = scalar_select 0, %s4, %s2
  $region1: #{tpu_custom_call.1} parent=0
    #allocation2 [shape = 'u8[8192]{0}', space=vmem, size = 0x2000, scoped, tag = 'input window, operand 0, single buffered']
    #allocation3 [shape = 's32[1]{0}', space=sflag, size = 0x4, scoped, tag = 'scoped memory for tpu_custom_call.1']
    #allocation4 [shape = 's32[1]{0}', space=sflag, size = 0x4, scoped, tag = 'scoped memory for tpu_custom_call.1']
    #allocation5 [shape = 'u8[8192]{0}', space=vmem, size = 0x2000, scoped, tag = 'output window, operand 0, single buffered']
    %6 = vsyncpa [#allocation3], 0
    %7 = vsyncpa [#allocation4], 0
    // Predicated region
    $region2: #{tpu_custom_call.1} parent=1 // pred_check
      _
    $region3: #{tpu_custom_call.1} parent=1 // pred_check_branch
      %9 = sbr.rel (0) target = $region5
    $region4: #{tpu_custom_call.1} parent=1 // pred_region
      %s11 = ssub.s32 256, 256
      %12 = vsyncadd [#allocation3], %s11
      %s13 = sshll.u32 [#allocation2], 4
      %s14 = int_to_ptr.vmem [resolvable:$true] %s13
      %19 = dma.hbm_to_vmem [thread:$0]  %s0, 256, %s14, [#allocation3], 128, 128, 8
    $region5: #{tpu_custom_call.1} parent=1 // pred_fallthru
      _
    // Predicated region
    $region6: #{tpu_custom_call.1} parent=1 // pred_check
      _
    $region7: #{tpu_custom_call.1} parent=1 // pred_check_branch
      %21 = sbr.rel (0) target = $region9
    $region8: #{tpu_custom_call.1} parent=1 // pred_region
      %22 = dma.done [#allocation3], 256
    $region9: #{tpu_custom_call.1} parent=1 // pred_fallthru
      _
    %v23 = vld [vmem:[#allocation2] sm:$0xff]
    %v24 = vld [vmem:[#allocation2 + $0x8] sm:$0xff]
    %v25 = vmax.f32 %v23, 0.11
    %v26 = vmax.f32 %v24, 0.11
    %27 = vst [vmem:[#allocation5] sm:$0xff] %v25
    %28 = vst [vmem:[#allocation5 + $0x8] sm:$0xff] %v26
    // Predicated region
    $region10: #{tpu_custom_call.1} parent=1 // pred_check
      _
    $region11: #{tpu_custom_call.1} parent=1 // pred_check_branch
      %30 = sbr.rel (0) target = $region13
    $region12: #{tpu_custom_call.1} parent=1 // pred_region
      %s32 = ssub.s32 256, 256
      %33 = vsyncadd [#allocation4], %s32
      %s34 = sshll.u32 [#allocation5], 4
      %s35 = int_to_ptr.vmem [resolvable:$true] %s34
      %40 = dma.vmem_to_hbm [thread:$0]  %s35, 256, %s1, [#allocation4], 128, 128, 8
    $region13: #{tpu_custom_call.1} parent=1 // pred_fallthru
      _
    // Predicated region
    $region14: #{tpu_custom_call.1} parent=1 // pred_check
      _
    $region15: #{tpu_custom_call.1} parent=1 // pred_check_branch
      %42 = sbr.rel (0) target = $region17
    $region16: #{tpu_custom_call.1} parent=1 // pred_region
      %43 = dma.done [#allocation4], 256
    $region17: #{tpu_custom_call.1} parent=1 // pred_fallthru
      _
    %44 = vsyncpa [#allocation3], 1
    %45 = vsyncpa [#allocation4], 1

</llo_original>
